<compile_context>
chip_gen: v5e
topology: v5e:2x2
jax: 0.10.0
libtpu: 0.0.40
codegen_flags: <defaults>
</compile_context>

<pallas_src>
import functools

import jax
import jax.numpy as jnp
from jax.experimental import pallas as pl
from jax.experimental.pallas import tpu as pltpu


def _block_kernel(x_ref, w_ref, b_ref, g_ref, o_ref, *, eps, use_mxu):
    # x_ref: (1, C_in, TN)   input tile (native dtype)
    # w_ref: (C_out, C_in)   conv weight (resident, constant index_map, native dtype)
    # b_ref: (C_out, 1)      conv bias, float32
    # g_ref: (C_out, 1)      RMSNorm gain * sqrt(C_out), float32
    # o_ref: (1, C_out, TN)  output tile
    x = x_ref[0]                                               # (C_in, TN)
    w = w_ref[...]                                             # (C_out, C_in)

    if use_mxu:
        # 1x1 Conv1d == channel matmul on the MXU, f32 accumulation.
        h = jnp.dot(w, x, preferred_element_type=jnp.float32)  # (C_out, TN)
    else:
        # Tiny K: unrolled VPU broadcast-FMA avoids the padded MXU pass.
        wf = w.astype(jnp.float32)
        xf = x.astype(jnp.float32)
        c_in = xf.shape[0]
        h = wf[:, 0:1] * xf[0:1, :]
        for c in range(1, c_in):
            h = h + wf[:, c : c + 1] * xf[c : c + 1, :]

    h = h + b_ref[...]                                         # f32 bias broadcast

    # RMSNorm over channels: F.normalize(h, dim=channel) * g * sqrt(C_out).
    # rsqrt(max(sumsq, eps^2)) == 1 / max(||h||_2, eps)  (F.normalize clamp).
    sumsq = jnp.sum(h * h, axis=0, keepdims=True)              # (1, TN)
    inv = jax.lax.rsqrt(jnp.maximum(sumsq, eps * eps))         # (1, TN)
    y = h * inv * g_ref[...]                                   # (C_out, TN)

    # SiLU; Dropout(p=0.0) is the identity.
    y = y * jax.nn.sigmoid(y)

    o_ref[0] = y.astype(o_ref.dtype)


def _vmem_budget_and_limit():
    """Per-generation (double-buffered footprint budget, vmem_limit_bytes)."""
    kind = ""
    try:
        kind = jax.devices()[0].device_kind.lower()
    except Exception:
        pass
    if ("v5" in kind) or ("v6" in kind):
        # 128 MiB physical VMEM: allow big tiles, raise the scoped limit.
        return 40 * 1024 * 1024, 100 * 1024 * 1024
    # v7x has 64 MiB per TensorCore; be conservative for it / unknown gens.
    return 24 * 1024 * 1024, 48 * 1024 * 1024


def _pick_tn(n_pad, c_in, c_out, itemsize, batch, budget_bytes):
    """Largest lane-dense (multiple of 128) divisor of n_pad whose
    double-buffered footprint fits the budget, keeping >= 2 grid steps when
    batch == 1 so both v7x TensorCores get work."""
    sub = 16 if itemsize < 4 else 8                    # sublane packing
    c_in_p = -(-c_in // sub) * sub
    c_out_p = -(-c_out // sub) * sub
    # Fixed (double-buffered) resident operands: weight + f32 bias + f32 gain.
    w_lanes = max(128, -(-c_in // 128) * 128)
    fixed = 2 * (c_out_p * w_lanes * itemsize + 2 * (-(-c_out // 8) * 8) * 128 * 4)
    per_col = 2 * (c_in_p + c_out_p) * itemsize        # 2 bufs x (in + out) per column
    avail = max(budget_bytes - fixed, 128 * per_col)
    max_tn = max(128, (avail // per_col) // 128 * 128)
    if batch == 1 and n_pad >= 256:
        max_tn = min(max_tn, (n_pad // 2) // 128 * 128)
    max_tn = min(max_tn, n_pad)
    for tn in range(max_tn, 127, -128):
        if n_pad % tn == 0:
            return tn
    return min(128, n_pad)


def block_forward(x, w, b, g, scale_shift=None):
    """Fused Block forward.

    x: (B, C_in, N)       input
    w: (C_out, C_in)      Conv1d(kernel_size=1) weight (squeezed kernel dim)
    b: (C_out,)           Conv1d bias
    g: (1, C_out, 1)      RMSNorm gain parameter
    Returns (B, C_out, N).
    """
    if scale_shift is not None:
        # TODO(synk): fuse the optional `x * (scale + 1) + shift` branch; the
        # default forward path (scale_shift=None) is implemented here.
        raise NotImplementedError("scale_shift path not fused")

    B, C_in, N = x.shape
    C_out = w.shape[0]
    eps = 1e-12
    itemsize = jnp.dtype(x.dtype).itemsize

    budget, vmem_limit = _vmem_budget_and_limit()

    # Pad N to a multiple of 128 for lane-dense (unmasked) stores; slice after.
    n_pad = -(-N // 128) * 128
    if n_pad != N:
        x = jnp.pad(x, ((0, 0), (0, 0), (0, n_pad - N)))

    tn = _pick_tn(n_pad, C_in, C_out, itemsize, B, budget)

    # Small per-channel params stay float32; fold sqrt(C_out) into g once.
    g2 = g.reshape(C_out, 1).astype(jnp.float32) * (float(C_out) ** 0.5)
    b2 = b.reshape(C_out, 1).astype(jnp.float32)
    # Weight in the activation dtype so bf16 models stay on the MXU-native path.
    w2 = w.astype(x.dtype)

    use_mxu = C_in >= 32
    kernel = functools.partial(_block_kernel, eps=eps, use_mxu=use_mxu)

    out = pl.pallas_call(
        kernel,
        out_shape=jax.ShapeDtypeStruct((B, C_out, n_pad), x.dtype),
        grid_spec=pl.GridSpec(
            grid=(B, n_pad // tn),
            in_specs=[
                pl.BlockSpec((1, C_in, tn), lambda bi, ni: (bi, 0, ni)),
                pl.BlockSpec((C_out, C_in), lambda bi, ni: (0, 0)),
                pl.BlockSpec((C_out, 1), lambda bi, ni: (0, 0)),
                pl.BlockSpec((C_out, 1), lambda bi, ni: (0, 0)),
            ],
            out_specs=pl.BlockSpec((1, C_out, tn), lambda bi, ni: (bi, 0, ni)),
        ),
        compiler_params=pltpu.CompilerParams(
            dimension_semantics=("parallel", "parallel"),
            vmem_limit_bytes=vmem_limit,
        ),
    )(x, w2, b2, g2)

    if n_pad != N:
        out = out[:, :, :N]
    return out


if __name__ == "__main__":
    key = jax.random.PRNGKey(0)
    B, C_in, C_out, N = 2, 4, 8, 16  # batch, in-channels, out-channels, n_node
    kx, kw, kb = jax.random.split(key, 3)

    x = jax.random.normal(kx, (B, C_in, N), dtype=jnp.float32)
    w = jax.random.normal(kw, (C_out, C_in), dtype=jnp.float32) * 0.5
    b = jax.random.normal(kb, (C_out,), dtype=jnp.float32) * 0.1
    g = jnp.ones((1, C_out, 1), dtype=jnp.float32)  # nn.Parameter(torch.ones(1, dim, 1))

    out = jax.block_until_ready(block_forward(x, w, b, g))

    # Pure-JAX reference of Block.forward (scale_shift=None, dropout p=0).
    h = jnp.einsum("oc,bcn->bon", w, x) + b[None, :, None]
    norm = jnp.maximum(jnp.sqrt(jnp.sum(h * h, axis=1, keepdims=True)), 1e-12)
    ref = (h / norm) * g * (float(C_out) ** 0.5)
    ref = ref * jax.nn.sigmoid(ref)  # SiLU

    assert out.shape == (B, C_out, N)
    assert jnp.allclose(out, ref, atol=1e-5, rtol=1e-5), "mismatch vs reference"

    print("KERNEL_OK")
</pallas_src>

<mosaic_0001>
module attributes {stable_mosaic.version = 11 : i64} {
  func.func @_block_kernel(%arg0: i32, %arg1: i32, %arg2: memref<1x4x128xf32, #tpu.memory_space<vmem>>, %arg3: memref<8x4xf32, #tpu.memory_space<vmem>>, %arg4: memref<8x1xf32, #tpu.memory_space<vmem>>, %arg5: memref<8x1xf32, #tpu.memory_space<vmem>>, %arg6: memref<1x8x128xf32, #tpu.memory_space<vmem>>) attributes {dimension_semantics = [#tpu.dimension_semantics<parallel>, #tpu.dimension_semantics<parallel>], iteration_bounds = array<i64: 2, 1>, scalar_prefetch = 0 : i64, scratch_operands = 0 : i64, tpu.core_type = #tpu.core_type<tc>, window_params = [{transform_indices = @transform_0, window_bounds = array<i64: 1, 4, 128>}, {pipeline_mode = #tpu.pipeline_mode<synchronous>, transform_indices = @transform_1, window_bounds = array<i64: 8, 4>}, {pipeline_mode = #tpu.pipeline_mode<synchronous>, transform_indices = @transform_2, window_bounds = array<i64: 8, 1>}, {pipeline_mode = #tpu.pipeline_mode<synchronous>, transform_indices = @transform_3, window_bounds = array<i64: 8, 1>}, {transform_indices = @transform_4, window_bounds = array<i64: 1, 8, 128>}]} {
    %c0 = arith.constant 0 : index
    %c0_0 = arith.constant 0 : index
    %c0_1 = arith.constant 0 : index
    %0 = vector.load %arg2[%c0, %c0_0, %c0_1] : memref<1x4x128xf32, #tpu.memory_space<vmem>>, vector<1x4x128xf32>
    %1 = vector.shape_cast %0 : vector<1x4x128xf32> to vector<4x128xf32>
    %c0_2 = arith.constant 0 : index
    %c0_3 = arith.constant 0 : index
    %2 = vector.load %arg3[%c0_2, %c0_3] : memref<8x4xf32, #tpu.memory_space<vmem>>, vector<8x4xf32>
    %3 = vector.extract_strided_slice %2 {offsets = [0, 0], sizes = [8, 1], strides = [1, 1]} : vector<8x4xf32> to vector<8x1xf32>
    %4 = vector.extract_strided_slice %1 {offsets = [0, 0], sizes = [1, 128], strides = [1, 1]} : vector<4x128xf32> to vector<1x128xf32>
    %5 = vector.broadcast %3 : vector<8x1xf32> to vector<8x128xf32>
    %6 = vector.broadcast %4 : vector<1x128xf32> to vector<8x128xf32>
    %7 = arith.mulf %5, %6 : vector<8x128xf32>
    %8 = vector.extract_strided_slice %2 {offsets = [0, 1], sizes = [8, 1], strides = [1, 1]} : vector<8x4xf32> to vector<8x1xf32>
    %9 = vector.extract_strided_slice %1 {offsets = [1, 0], sizes = [1, 128], strides = [1, 1]} : vector<4x128xf32> to vector<1x128xf32>
    %10 = vector.broadcast %8 : vector<8x1xf32> to vector<8x128xf32>
    %11 = vector.broadcast %9 : vector<1x128xf32> to vector<8x128xf32>
    %12 = arith.mulf %10, %11 : vector<8x128xf32>
    %13 = arith.addf %7, %12 : vector<8x128xf32>
    %14 = vector.extract_strided_slice %2 {offsets = [0, 2], sizes = [8, 1], strides = [1, 1]} : vector<8x4xf32> to vector<8x1xf32>
    %15 = vector.extract_strided_slice %1 {offsets = [2, 0], sizes = [1, 128], strides = [1, 1]} : vector<4x128xf32> to vector<1x128xf32>
    %16 = vector.broadcast %14 : vector<8x1xf32> to vector<8x128xf32>
    %17 = vector.broadcast %15 : vector<1x128xf32> to vector<8x128xf32>
    %18 = arith.mulf %16, %17 : vector<8x128xf32>
    %19 = arith.addf %13, %18 : vector<8x128xf32>
    %20 = vector.extract_strided_slice %2 {offsets = [0, 3], sizes = [8, 1], strides = [1, 1]} : vector<8x4xf32> to vector<8x1xf32>
    %21 = vector.extract_strided_slice %1 {offsets = [3, 0], sizes = [1, 128], strides = [1, 1]} : vector<4x128xf32> to vector<1x128xf32>
    %22 = vector.broadcast %20 : vector<8x1xf32> to vector<8x128xf32>
    %23 = vector.broadcast %21 : vector<1x128xf32> to vector<8x128xf32>
    %24 = arith.mulf %22, %23 : vector<8x128xf32>
    %25 = arith.addf %19, %24 : vector<8x128xf32>
    %c0_4 = arith.constant 0 : index
    %c0_5 = arith.constant 0 : index
    %26 = vector.load %arg4[%c0_4, %c0_5] : memref<8x1xf32, #tpu.memory_space<vmem>>, vector<8x1xf32>
    %27 = vector.broadcast %26 : vector<8x1xf32> to vector<8x128xf32>
    %28 = arith.addf %25, %27 : vector<8x128xf32>
    %29 = arith.mulf %28, %28 : vector<8x128xf32>
    %cst = arith.constant dense<0.000000e+00> : vector<128xf32>
    %30 = vector.multi_reduction <add>, %29, %cst [0] : vector<8x128xf32> to vector<128xf32>
    %31 = vector.shape_cast %30 : vector<128xf32> to vector<1x128xf32>
    %cst_6 = arith.constant 1.000000e-24 : f32
    %32 = vector.broadcast %cst_6 : f32 to vector<1x128xf32>
    %33 = arith.maximumf %31, %32 : vector<1x128xf32>
    %34 = math.rsqrt %33 : vector<1x128xf32>
    %35 = vector.broadcast %34 : vector<1x128xf32> to vector<8x128xf32>
    %36 = arith.mulf %28, %35 : vector<8x128xf32>
    %c0_7 = arith.constant 0 : index
    %c0_8 = arith.constant 0 : index
    %37 = vector.load %arg5[%c0_7, %c0_8] : memref<8x1xf32, #tpu.memory_space<vmem>>, vector<8x1xf32>
    %38 = vector.broadcast %37 : vector<8x1xf32> to vector<8x128xf32>
    %39 = arith.mulf %36, %38 : vector<8x128xf32>
    %40 = arith.negf %39 : vector<8x128xf32>
    %41 = math.exp %40 : vector<8x128xf32>
    %cst_9 = arith.constant 1.000000e+00 : f32
    %42 = vector.broadcast %cst_9 : f32 to vector<8x128xf32>
    %43 = arith.addf %42, %41 : vector<8x128xf32>
    %44 = arith.divf %42, %43 : vector<8x128xf32>
    %45 = arith.mulf %39, %44 : vector<8x128xf32>
    %c0_10 = arith.constant 0 : index
    %c0_11 = arith.constant 0 : index
    %c0_12 = arith.constant 0 : index
    %46 = vector.load %arg6[%c0_10, %c0_11, %c0_12] : memref<1x8x128xf32, #tpu.memory_space<vmem>>, vector<1x8x128xf32>
    %47 = vector.shape_cast %46 : vector<1x8x128xf32> to vector<8x128xf32>
    %48 = vector.shape_cast %45 : vector<8x128xf32> to vector<1x8x128xf32>
    tpu.vector_store %arg6[%c0_10, %c0_11, %c0_12], %48 {strides = array<i32>} : memref<1x8x128xf32, #tpu.memory_space<vmem>>, vector<1x8x128xf32>,
    return
  }
  func.func @transform_0(%arg0: i32, %arg1: i32) -> (i32, i32, i32) {
    %c0_i32 = arith.constant 0 : i32
    %c0_i32_0 = arith.constant 0 : i32
    return %arg0, %c0_i32, %arg1 : i32, i32, i32
  }
  func.func @transform_1(%arg0: i32, %arg1: i32) -> (i32, i32) {
    %c0_i32 = arith.constant 0 : i32
    %c0_i32_0 = arith.constant 0 : i32
    %c0_i32_1 = arith.constant 0 : i32
    return %c0_i32, %c0_i32_0 : i32, i32
  }
  func.func @transform_2(%arg0: i32, %arg1: i32) -> (i32, i32) {
    %c0_i32 = arith.constant 0 : i32
    %c0_i32_0 = arith.constant 0 : i32
    %c0_i32_1 = arith.constant 0 : i32
    return %c0_i32, %c0_i32_0 : i32, i32
  }
  func.func @transform_3(%arg0: i32, %arg1: i32) -> (i32, i32) {
    %c0_i32 = arith.constant 0 : i32
    %c0_i32_0 = arith.constant 0 : i32
    %c0_i32_1 = arith.constant 0 : i32
    return %c0_i32, %c0_i32_0 : i32, i32
  }
  func.func @transform_4(%arg0: i32, %arg1: i32) -> (i32, i32, i32) {
    %c0_i32 = arith.constant 0 : i32
    %c0_i32_0 = arith.constant 0 : i32
    return %arg0, %c0_i32, %arg1 : i32, i32, i32
  }
}

</mosaic_0001>

<llo_original>
// kernel: tpu_custom_call.1
$region0: #{tpu_custom_call.1}
  #allocation0 [shape = 'u32[]', space=smem, size = 0x4, offset = 0x4, fixed_abs, tag = 'smem constant byte address 0x4 - core index']
  #allocation1 [shape = 'u32[72,128]{1,0:T(1,128)}', space=vmem, size = 0x9000, scoped, tag = 'internal scratch']
  %s0 = inlined_call_operand.vmem [shape: f32[2,4,128], index: 0, kind: input, shape index: {}]
  %s1 = inlined_call_operand.vmem [shape: f32[8,4], index: 1, kind: input, shape index: {}]
  %s2 = inlined_call_operand.vmem [shape: f32[8,1], index: 2, kind: input, shape index: {}]
  %s3 = inlined_call_operand.vmem [shape: f32[8,1], index: 3, kind: input, shape index: {}]
  %s4 = inlined_call_operand.hbm [shape: f32[2,8,128], index: 4, kind: output, shape index: {}]
  %s5 = sld [smem:[#allocation0]]
  $region49: #{tpu_custom_call.1} parent=0
    _
  %s7 = ssub.s32 1, %s5
  %s8 = scalar_select 0, %s7, %s5
  $region1: #{tpu_custom_call.1} parent=0
    #allocation2 [shape = 'u8[8192]{0}', space=vmem, size = 0x2000, scoped, tag = 'output window, operand 0']
    #allocation3 [shape = 's32[2]{0}', space=sflag, size = 0x8, scoped, tag = 'scoped memory for tpu_custom_call.1']
    %9 = vsyncpa [#allocation3], 0
    %s10 = scalar_lea.sflag [#allocation3], 1
    %11 = vsyncpa %s10, 0
    loop: start=0, step=1, limit=4
    $region2: #{tpu_custom_call.1} parent=1 // loop_pre_header
      _
    $region3: #{tpu_custom_call.1} parent=1 // loop_header
      %s13 = sphi 0, %s17
      %p14 = scmp.ge.s32.totalorder %s13, 4
      %s20 = sphi 0, %s32
      %s21 = sphi 0, %s28
      %s22 = sphi 0, %s20
      %s23 = sphi 0, %s21
      %s24 = sphi 0, %s22
      %s25 = sphi 0, %s23
      %s37 = sphi 0, %s39
      %s40 = sphi 0, %s37
      %s41 = sphi 0, %s40
      %s57 = sphi 0, %s41
      %s61 = sphi 0, %s61
      %s63 = sphi 0, %s61
      %s64 = sphi 0, %s63
      %s78 = sphi 0, %s64
      %s82 = sphi 0, %s82
      %s84 = sphi 0, %s82
      %s85 = sphi 0, %s84
      %s99 = sphi 0, %s85
      %s103 = sphi 0, %s103
      %s105 = sphi 0, %s103
      %s106 = sphi 0, %s105
      %s120 = sphi 0, %s106
      %s128 = sphi 0, %s130
      %s131 = sphi 0, %s128
      %s132 = sphi 0, %s131
      %s148 = sphi 0, %s132
    $region4: #{tpu_custom_call.1} parent=1 // loop_header_branch
      %16 = sbr.rel (%p14) target = $region8
    $region5: #{tpu_custom_call.1} parent=1 // loop_body
      %s18 = ssub.s32 %s13, 1
      %s19 = ssub.s32 %s13, 2
      %s26 = sadd.s32 1, %s21
      %p27 = scmp.ge.s32.totalorder %s26, 1
      %s28 = scalar_select %p27, 0, %s26
      %s29 = sadd.s32 1, %s20
      %s30 = scalar_select %p27, %s29, %s20
      %p31 = scmp.ge.s32.totalorder %s30, 2
      %s32 = scalar_select %p31, 0, %s30
      %s33 = ssub.s32 %s20, %s32
      %s34 = ssub.s32 %s21, %s28
      %s35 = sor.u32 %s33, %s34
      %p36 = scmp.eq.s32.totalorder %s35, 0
      %s38 = sadd.s32 %s37, 1
      %s39 = scalar_select %p36, %s37, %s38
      %p42 = pneg %p36
      %p43 = scmp.eq.s32.totalorder %s13, 1
      %p44 = por %p42, %p43
      %p45 = scmp.ne.s32.totalorder %s37, %s40
      %p46 = scmp.eq.s32.totalorder %s13, 0
      %p47 = por %p45, %p46
      %p48 = scmp.ne.s32.totalorder %s37, %s40
      %p49 = scmp.eq.s32.totalorder %s18, 1
      %p50 = por %p48, %p49
      %p51 = scmp.ne.s32.totalorder %s40, %s41
      %p52 = scmp.eq.s32.totalorder %s18, 0
      %p53 = por %p51, %p52
      %p54 = scmp.ne.s32.totalorder %s40, %s41
      %p55 = scmp.eq.s32.totalorder %s19, 1
      %p56 = por %p54, %p55
      %p58 = scmp.ne.s32.totalorder %s41, %s57
      %p59 = scmp.eq.s32.totalorder %s19, 0
      %p60 = por %p58, %p59
      %s62 = sadd.s32 %s61, 1
      %p65 = scmp.eq.s32.totalorder %s13, 1
      %p66 = scmp.ne.s32.totalorder %s61, %s63
      %p67 = scmp.eq.s32.totalorder %s13, 0
      %p68 = por %p66, %p67
      %p69 = scmp.ne.s32.totalorder %s61, %s63
      %p70 = scmp.eq.s32.totalorder %s18, 1
      %p71 = por %p69, %p70
      %p72 = scmp.ne.s32.totalorder %s63, %s64
      %p73 = scmp.eq.s32.totalorder %s18, 0
      %p74 = por %p72, %p73
      %p75 = scmp.ne.s32.totalorder %s63, %s64
      %p76 = scmp.eq.s32.totalorder %s19, 1
      %p77 = por %p75, %p76
      %p79 = scmp.ne.s32.totalorder %s64, %s78
      %p80 = scmp.eq.s32.totalorder %s19, 0
      %p81 = por %p79, %p80
      %s83 = sadd.s32 %s82, 1
      %p86 = scmp.eq.s32.totalorder %s13, 1
      %p87 = scmp.ne.s32.totalorder %s82, %s84
      %p88 = scmp.eq.s32.totalorder %s13, 0
      %p89 = por %p87, %p88
      %p90 = scmp.ne.s32.totalorder %s82, %s84
      %p91 = scmp.eq.s32.totalorder %s18, 1
      %p92 = por %p90, %p91
      %p93 = scmp.ne.s32.totalorder %s84, %s85
      %p94 = scmp.eq.s32.totalorder %s18, 0
      %p95 = por %p93, %p94
      %p96 = scmp.ne.s32.totalorder %s84, %s85
      %p97 = scmp.eq.s32.totalorder %s19, 1
      %p98 = por %p96, %p97
      %p100 = scmp.ne.s32.totalorder %s85, %s99
      %p101 = scmp.eq.s32.totalorder %s19, 0
      %p102 = por %p100, %p101
      %s104 = sadd.s32 %s103, 1
      %p107 = scmp.eq.s32.totalorder %s13, 1
      %p108 = scmp.ne.s32.totalorder %s103, %s105
      %p109 = scmp.eq.s32.totalorder %s13, 0
      %p110 = por %p108, %p109
      %p111 = scmp.ne.s32.totalorder %s103, %s105
      %p112 = scmp.eq.s32.totalorder %s18, 1
      %p113 = por %p111, %p112
      %p114 = scmp.ne.s32.totalorder %s105, %s106
      %p115 = scmp.eq.s32.totalorder %s18, 0
      %p116 = por %p114, %p115
      %p117 = scmp.ne.s32.totalorder %s105, %s106
      %p118 = scmp.eq.s32.totalorder %s19, 1
      %p119 = por %p117, %p118
      %p121 = scmp.ne.s32.totalorder %s106, %s120
      %p122 = scmp.eq.s32.totalorder %s19, 0
      %p123 = por %p121, %p122
      %s124 = ssub.s32 %s20, %s32
      %s125 = ssub.s32 %s21, %s28
      %s126 = sor.u32 %s124, %s125
      %p127 = scmp.eq.s32.totalorder %s126, 0
      %s129 = sadd.s32 %s128, 1
      %s130 = scalar_select %p127, %s128, %s129
      %p133 = pneg %p127
      %p134 = scmp.eq.s32.totalorder %s13, 1
      %p135 = por %p133, %p134
      %p136 = scmp.ne.s32.totalorder %s128, %s131
      %p137 = scmp.eq.s32.totalorder %s13, 0
      %p138 = por %p136, %p137
      %p139 = scmp.ne.s32.totalorder %s128, %s131
      %p140 = scmp.eq.s32.totalorder %s18, 1
      %p141 = por %p139, %p140
      %p142 = scmp.ne.s32.totalorder %s131, %s132
      %p143 = scmp.eq.s32.totalorder %s18, 0
      %p144 = por %p142, %p143
      %p145 = scmp.ne.s32.totalorder %s131, %s132
      %p146 = scmp.eq.s32.totalorder %s19, 1
      %p147 = por %p145, %p146
      %p149 = scmp.ne.s32.totalorder %s132, %s148
      %p150 = scmp.eq.s32.totalorder %s19, 0
      %p151 = por %p149, %p150
      %p152 = scmp.le.s32.totalorder 1, %s13
      %p153 = scmp.lt.s32.totalorder %s13, 3
      %p154 = pnand %p152, %p153
      %p155 = pneg %p154
      // Predicated region
      $region9: #{tpu_custom_call.1} parent=5 // pred_check
        _
      $region10: #{tpu_custom_call.1} parent=5 // pred_check_branch
        %157 = sbr.rel (%p154) target = $region12
      $region11: #{tpu_custom_call.1} parent=5 // pred_region
        %s158 = ssub.s32 %s13, 1
        // Predicated region
        $region13: #{tpu_custom_call.1} parent=11 // pred_check
          %p159 = pneg %p74
        $region14: #{tpu_custom_call.1} parent=11 // pred_check_branch
          %161 = sbr.rel (%p159) target = $region16
        $region15: #{tpu_custom_call.1} parent=11 // pred_region
          _
        $region16: #{tpu_custom_call.1} parent=11 // pred_fallthru
          _
        // Predicated region
        $region17: #{tpu_custom_call.1} parent=11 // pred_check
          %p162 = pneg %p95
        $region18: #{tpu_custom_call.1} parent=11 // pred_check_branch
          %164 = sbr.rel (%p162) target = $region20
        $region19: #{tpu_custom_call.1} parent=11 // pred_region
          _
        $region20: #{tpu_custom_call.1} parent=11 // pred_fallthru
          _
        // Predicated region
        $region21: #{tpu_custom_call.1} parent=11 // pred_check
          %p165 = pneg %p116
        $region22: #{tpu_custom_call.1} parent=11 // pred_check_branch
          %167 = sbr.rel (%p165) target = $region24
        $region23: #{tpu_custom_call.1} parent=11 // pred_region
          _
        $region24: #{tpu_custom_call.1} parent=11 // pred_fallthru
          _
      $region12: #{tpu_custom_call.1} parent=5 // pred_fallthru
        _
      %p168 = scmp.lt.s32.totalorder %s13, 2
      // Predicated region
      $region25: #{tpu_custom_call.1} parent=5 // pred_check
        %p169 = pneg %p168
      $region26: #{tpu_custom_call.1} parent=5 // pred_check_branch
        %171 = sbr.rel (%p169) target = $region28
      $region27: #{tpu_custom_call.1} parent=5 // pred_region
        // Predicated region
        $region29: #{tpu_custom_call.1} parent=27 // pred_check
          %p172 = pneg %p47
        $region30: #{tpu_custom_call.1} parent=27 // pred_check_branch
          %174 = sbr.rel (%p172) target = $region32
        $region31: #{tpu_custom_call.1} parent=27 // pred_region
          %p175 = scmp.lt.s32.totalorder %s20, 1
          %s176 = scalar_select %p175, %s20, 1
          %p177 = scmp.lt.s32.totalorder %s21, 0
          %s178 = scalar_select %p177, %s21, 0
          %s179 = sadd.s32 %s178, %s176
          %s180 = smul.addr %s179, 4
          %s181 = scalar_lea.vmem %s0, %s180
        $region32: #{tpu_custom_call.1} parent=27 // pred_fallthru
          _
      $region28: #{tpu_custom_call.1} parent=5 // pred_fallthru
        _
      %p182 = scmp.le.s32.totalorder 1, %s13
      %p183 = scmp.lt.s32.totalorder %s13, 3
      %p184 = pnand %p182, %p183
      %p185 = pneg %p184
      // Predicated region
      $region33: #{tpu_custom_call.1} parent=5 // pred_check
        _
      $region34: #{tpu_custom_call.1} parent=5 // pred_check_branch
        %187 = sbr.rel (%p184) target = $region36
      $region35: #{tpu_custom_call.1} parent=5 // pred_region
        %s188 = ssub.s32 %s13, 1
        %p189 = scmp.lt.s32.totalorder %s22, 1
        %s190 = scalar_select %p189, %s22, 1
        %p191 = scmp.lt.s32.totalorder %s23, 0
        %s192 = scalar_select %p191, %s23, 0
        %s193 = sadd.s32 %s192, %s190
        %s194 = smul.addr %s193, 4
        %s195 = scalar_lea.vmem %s0, %s194
        %p196 = pneg %p53
        %p197 = pneg %p50
        %p198 = pneg %p74
        %p199 = pneg %p71
        %p200 = pneg %p95
        %p201 = pneg %p92
        %p202 = pneg %p116
        %p203 = pneg %p113
        %p204 = pneg %p144
        %p205 = pneg %p141
        %s206 = sand.u32 %s131, 1
        %s207 = scalar_lea.sflag [#allocation3], %s206
        %s208 = sand.u32 %s131, 1
        %s209 = smul.addr %s208, 8
        %s210 = scalar_lea.vmem [#allocation2], %s209
        %p211 = scmp.lt.s32.totalorder %s22, 1
        %s212 = scalar_select %p211, %s22, 1
        %p213 = scmp.lt.s32.totalorder %s23, 0
        %s214 = scalar_select %p213, %s23, 0
        %s215 = sadd.s32 %s214, %s212
        %s216 = smul.addr %s215, 4
        %s217 = scalar_lea.vmem %s0, %s216
        %v218 = vld [vmem:[%s217] sm:$0xf]
        %v219 = vld [vmem:[%s1] sm:$0xff]
        %221 = vset.pattern.permute.xlu0 0
        %222 = vperm.xlu0 %221, %v219
        %v223 = vpop.permute.xlu0 %222
        %v225 = vperm.slane %v218, 0
        %v226 = vmul.f32 %v223, %v225
        %227 = vset.pattern.permute.xlu0 1
        %228 = vperm.xlu0 %227, %v219
        %v229 = vpop.permute.xlu0 %228
        %v231 = vperm.slane %v218, 1
        %v232 = vmul.f32 %v229, %v231
        %v233 = vadd.f32 %v226, %v232
        %234 = vset.pattern.permute.xlu0 2
        %235 = vperm.xlu0 %234, %v219
        %v236 = vpop.permute.xlu0 %235
        %v238 = vperm.slane %v218, 2
        %v239 = vmul.f32 %v236, %v238
        %v240 = vadd.f32 %v233, %v239
        %241 = vset.pattern.permute.xlu0 3
        %242 = vperm.xlu0 %241, %v219
        %v243 = vpop.permute.xlu0 %242
        %v245 = vperm.slane %v218, 3
        %v246 = vmul.f32 %v243, %v245
        %v247 = vadd.f32 %v240, %v246
        %v248 = vld [vmem:[%s2] sm:$0xff]
        %250 = vset.pattern.permute.xlu0 0
        %251 = vperm.xlu0 %250, %v248
        %v252 = vpop.permute.xlu0 %251
        %v254 = vadd.f32 %v247, %v252
        %v255 = vmul.f32 %v254, %v254
        %v256 = vrot.slane %v255, 4
        %v257 = vadd.f32 %v255, %v256
        %v258 = vrot.slane %v257, 2
        %v259 = vadd.f32 %v257, %v258
        %v260 = vrot.slane %v259, 1
        %v261 = vadd.f32 %v259, %v260
        %v262 = vmax.f32 %v261, 1e-24
        %v263 = vrsqrt.pop %v262
        %v264 = vmul.f32 %v263, %v262
        %v265 = vmul.f32 %v264, %v263
        %v266 = vmul.f32 0.5, %v265
        %v267 = vsub.f32 1.5, %v266
        %v268 = vmul.f32 %v263, %v267
        %vm269 = vweird.f32 %v262
        %vm270 = vweird.f32 %v263
        %vm271 = vmor %vm269, %vm270
        %v272 = vsel %vm271, %v263, %v268
        %v273 = vmul.f32 %v254, %v272
        %v274 = vld [vmem:[%s3] sm:$0xff]
        %276 = vset.pattern.permute.xlu0 0
        %277 = vperm.xlu0 %276, %v274
        %v278 = vpop.permute.xlu0 %277
        %v280 = vmul.f32 %v273, %v278
        %v281 = vxor.u32 %v280, 2147483648
        %v282 = vmul.f32 %v281, 1.442695
        %v283 = vpow.pop %v282
        %v284 = vadd.f32 %v283, 1.0
        %v285 = vrcp.pop %v284
        %v286 = vmul.f32 %v284, %v285
        %v287 = vsub.f32 1.0, %v286
        %v288 = vmul.f32 %v285, %v287
        %v289 = vadd.f32 %v285, %v288
        %vm290 = vweird.f32 %v284
        %vm291 = vweird.f32 %v285
        %vm292 = vmor %vm290, %vm291
        %v293 = vsel %vm292, %v285, %v289
        %v294 = vand.u32 2147483647, %v284
        %vm295 = vcmp.eq.f32.partialorder %v294, 8.507059e+37
        %v296 = vand.u32 %v284, 2147483648
        %v297 = vor.u32 1.1754944e-38, %v296
        %v298 = vsel %vm295, %v297, %v293
        %v299 = vmul.f32 1.0, %v298
        %v300 = vmul.f32 %v280, %v299
        %301 = vst [vmem:[%s210] sm:$0xff] %v300
        %s302 = sand.u32 %s131, 1
        %s303 = scalar_lea.sflag [#allocation3], %s302
        %s304 = sand.u32 %s131, 1
        %s305 = smul.addr %s304, 8
        %s306 = scalar_lea.vmem [#allocation2], %s305
        // Predicated region
        $region37: #{tpu_custom_call.1} parent=35 // pred_check
          %p307 = pneg %p141
        $region38: #{tpu_custom_call.1} parent=35 // pred_check_branch
          %309 = sbr.rel (%p307) target = $region40
        $region39: #{tpu_custom_call.1} parent=35 // pred_region
          %311 = vsyncadd %s303, 0
          %s312 = sadd.s32 %s23, %s22
          %s313 = smul.addr %s312, 8
          %s314 = scalar_lea.hbm %s4, %s313
          %s316 = sshll.u32 %s306, 4
          %s317 = int_to_ptr.vmem [resolvable:$true] %s316
          %s318 = sshll.u32 %s314, 4
          %s319 = int_to_ptr.hbm [resolvable:$true] %s318
          %321 = dma.vmem_to_hbm [thread:$0]  %s317, 128, %s319, %s303
        $region40: #{tpu_custom_call.1} parent=35 // pred_fallthru
          _
      $region36: #{tpu_custom_call.1} parent=5 // pred_fallthru
        _
      %p322 = scmp.le.s32.totalorder 2, %s13
      // Predicated region
      $region41: #{tpu_custom_call.1} parent=5 // pred_check
        %p323 = pneg %p322
      $region42: #{tpu_custom_call.1} parent=5 // pred_check_branch
        %325 = sbr.rel (%p323) target = $region44
      $region43: #{tpu_custom_call.1} parent=5 // pred_region
        %s326 = ssub.s32 %s13, 2
        // Predicated region
        $region45: #{tpu_custom_call.1} parent=43 // pred_check
          %p327 = pneg %p147
        $region46: #{tpu_custom_call.1} parent=43 // pred_check_branch
          %329 = sbr.rel (%p327) target = $region48
        $region47: #{tpu_custom_call.1} parent=43 // pred_region
          %s330 = sand.u32 %s132, 1
          %s331 = scalar_lea.sflag [#allocation3], %s330
          %s332 = sand.u32 %s132, 1
          %s333 = smul.addr %s332, 8
          %s334 = scalar_lea.vmem [#allocation2], %s333
          %336 = dma.done %s331, 128
        $region48: #{tpu_custom_call.1} parent=43 // pred_fallthru
          _
      $region44: #{tpu_custom_call.1} parent=5 // pred_fallthru
        _
    $region6: #{tpu_custom_call.1} parent=1 // loop_footer
      %s17 = sadd.s32 1, %s13
    $region7: #{tpu_custom_call.1} parent=1 // loop_footer_branch
      %12 = sbr.rel target = $region3
    $region8: #{tpu_custom_call.1} parent=1 // loop_exit
      _
    %337 = vsyncpa [#allocation3], 1
    %s338 = scalar_lea.sflag [#allocation3], 1
    %339 = vsyncpa %s338, 1

</llo_original>
